<compile_context>
chip_gen: v6e
topology: v6e:2x2x1
jax: 0.10.0
libtpu: 0.0.40
codegen_flags: <defaults>
</compile_context>

<pallas_src>
import jax
import jax.numpy as jnp
from jax.experimental import pallas as pl
from jax.experimental.pallas import tpu as pltpu

_LANE = 128
_SUBLANE = 8
_MAX_TILE_ROWS = 2048   # 2048 x 128 x 4 B = 1 MiB per-input tile; 2 inputs x 2 bufs = 4 MiB
_NUM_SPLITS = 2         # leading "parallel" axis -> both TensorCores on v7x


def _sq_err_partial_kernel(pred_ref, targ_ref, out_ref):
    """Accumulate this split's partial sums of (pred - targ)^2 into an (8,128) block."""
    i = pl.program_id(1)

    @pl.when(i == 0)
    def _init():
        out_ref[...] = jnp.zeros_like(out_ref)

    d = pred_ref[...].astype(jnp.float32) - targ_ref[...].astype(jnp.float32)
    sq = d * d
    # Fold the tile's sublane groups onto the (8, 128) accumulator: pure VPU
    # vreg adds; no cross-lane XLU work until the tiny final reduce in JAX.
    out_ref[...] += jnp.sum(sq.reshape(-1, _SUBLANE, _LANE), axis=0)


def _round_up(x: int, m: int) -> int:
    return (x + m - 1) // m * m


def _sum_squared_error(predictions: jax.Array, targets: jax.Array) -> jax.Array:
    assert predictions.shape == targets.shape
    p = predictions.reshape(-1)
    t = targets.reshape(-1)
    n = p.size

    # Lane-dense layout: pad up to (NUM_SPLITS, rows_per_split, 128) with zeros.
    # Zero padding on both operands contributes exactly 0 to the SSE, so the
    # result stays exact for arbitrary input shapes (no divisibility asserts).
    rows_needed = pl.cdiv(n, _LANE)
    rows_per_split = pl.cdiv(rows_needed, _NUM_SPLITS)
    tile_rows = min(_MAX_TILE_ROWS, _round_up(rows_per_split, _SUBLANE))
    rows_per_split = _round_up(rows_per_split, tile_rows)
    n_padded = _NUM_SPLITS * rows_per_split * _LANE
    if n_padded != n:
        p = jnp.pad(p, (0, n_padded - n))
        t = jnp.pad(t, (0, n_padded - n))
    p = p.reshape(_NUM_SPLITS, rows_per_split, _LANE)
    t = t.reshape(_NUM_SPLITS, rows_per_split, _LANE)

    grid = (_NUM_SPLITS, rows_per_split // tile_rows)
    in_spec = pl.BlockSpec((None, tile_rows, _LANE), lambda s, i: (s, i, 0))
    out_spec = pl.BlockSpec((None, _SUBLANE, _LANE), lambda s, i: (s, 0, 0))

    partials = pl.pallas_call(
        _sq_err_partial_kernel,
        out_shape=jax.ShapeDtypeStruct((_NUM_SPLITS, _SUBLANE, _LANE), jnp.float32),
        grid_spec=pltpu.PrefetchScalarGridSpec(
            num_scalar_prefetch=0,
            grid=grid,
            in_specs=[in_spec, in_spec],
            out_specs=out_spec,
        ),
        compiler_params=pltpu.CompilerParams(
            dimension_semantics=("parallel", "arbitrary"),
        ),
    )(p, t)
    # Tiny final reduce (2 * 8 * 128 partials) + divide stay in plain JAX.
    return jnp.sum(partials)


class RecommenderCriterion:
    """JAX/Pallas port of the PyTorch RecommenderCriterion (mean-squared-error)."""

    def __init__(self, loss_weights=None):
        self.loss_weights = dict(loss_weights or {})

    def __call__(self, predictions: jax.Array, targets: jax.Array):
        n_elems = predictions.size
        sse = _sum_squared_error(predictions, targets)
        mse = sse / jnp.float32(n_elems)
        losses = {"mse": mse}
        losses["overall"] = sum(
            losses[name] * self.loss_weights.get(name, 1) for name in list(losses)
        )
        return losses


if __name__ == "__main__":
    key = jax.random.PRNGKey(0)
    kp, kt = jax.random.split(key)

    # Small recommender-style shapes: batch of 32 users, 128 item scores each.
    batch, items = 32, 128
    predictions = jax.random.normal(kp, (batch, items), dtype=jnp.float32)
    targets = jax.random.normal(kt, (batch, items), dtype=jnp.float32)

    criterion = RecommenderCriterion(loss_weights={"mse": 1.0})
    losses = criterion(predictions, targets)
    losses = jax.tree_util.tree_map(jax.block_until_ready, losses)

    # Reference check against plain JAX MSE.
    ref = jnp.mean((predictions - targets) ** 2)
    assert jnp.allclose(losses["mse"], ref, rtol=1e-5, atol=1e-6), (losses["mse"], ref)
    assert jnp.allclose(losses["overall"], ref, rtol=1e-5, atol=1e-6)

    print("KERNEL_OK")
</pallas_src>

<mosaic_0001>
module attributes {stable_mosaic.version = 11 : i64} {
  func.func @_sq_err_partial_kernel(%arg0: i32, %arg1: i32, %arg2: memref<1x16x128xf32, #tpu.memory_space<vmem>>, %arg3: memref<1x16x128xf32, #tpu.memory_space<vmem>>, %arg4: memref<1x8x128xf32, #tpu.memory_space<vmem>>) attributes {dimension_semantics = [#tpu.dimension_semantics<parallel>, #tpu.dimension_semantics<arbitrary>], iteration_bounds = array<i64: 2, 1>, scalar_prefetch = 0 : i64, scratch_operands = 0 : i64, tpu.core_type = #tpu.core_type<tc>, window_params = [{transform_indices = @transform_0, window_bounds = array<i64: 1, 16, 128>}, {transform_indices = @transform_1, window_bounds = array<i64: 1, 16, 128>}, {transform_indices = @transform_2, window_bounds = array<i64: 1, 8, 128>}]} {
    %c0_i32 = arith.constant 0 : i32
    %0 = arith.cmpi eq, %arg1, %c0_i32 : i32
    %1 = arith.extui %0 : i1 to i32
    %c0_i32_0 = arith.constant 0 : i32
    %2 = arith.cmpi ne, %1, %c0_i32_0 : i32
    scf.if %2 {
      %cst_12 = arith.constant 0.000000e+00 : f32
      %17 = vector.broadcast %cst_12 : f32 to vector<8x128xf32>
      %c0_13 = arith.constant 0 : index
      %c0_14 = arith.constant 0 : index
      %c0_15 = arith.constant 0 : index
      %18 = vector.load %arg4[%c0_13, %c0_14, %c0_15] : memref<1x8x128xf32, #tpu.memory_space<vmem>>, vector<1x8x128xf32>
      %19 = vector.shape_cast %18 : vector<1x8x128xf32> to vector<8x128xf32>
      %20 = vector.shape_cast %17 : vector<8x128xf32> to vector<1x8x128xf32>
      tpu.vector_store %arg4[%c0_13, %c0_14, %c0_15], %20 {strides = array<i32>} : memref<1x8x128xf32, #tpu.memory_space<vmem>>, vector<1x8x128xf32>,
    } else {
    }
    %c0 = arith.constant 0 : index
    %c0_1 = arith.constant 0 : index
    %c0_2 = arith.constant 0 : index
    %3 = vector.load %arg2[%c0, %c0_1, %c0_2] : memref<1x16x128xf32, #tpu.memory_space<vmem>>, vector<1x16x128xf32>
    %4 = vector.shape_cast %3 : vector<1x16x128xf32> to vector<16x128xf32>
    %c0_3 = arith.constant 0 : index
    %c0_4 = arith.constant 0 : index
    %c0_5 = arith.constant 0 : index
    %5 = vector.load %arg3[%c0_3, %c0_4, %c0_5] : memref<1x16x128xf32, #tpu.memory_space<vmem>>, vector<1x16x128xf32>
    %6 = vector.shape_cast %5 : vector<1x16x128xf32> to vector<16x128xf32>
    %7 = arith.subf %4, %6 : vector<16x128xf32>
    %8 = arith.mulf %7, %7 : vector<16x128xf32>
    %c0_6 = arith.constant 0 : index
    %c0_7 = arith.constant 0 : index
    %c0_8 = arith.constant 0 : index
    %9 = vector.load %arg4[%c0_6, %c0_7, %c0_8] : memref<1x8x128xf32, #tpu.memory_space<vmem>>, vector<1x8x128xf32>
    %10 = vector.shape_cast %9 : vector<1x8x128xf32> to vector<8x128xf32>
    %11 = vector.shape_cast %8 : vector<16x128xf32> to vector<2x8x128xf32>
    %cst = arith.constant dense<0.000000e+00> : vector<8x128xf32>
    %12 = vector.multi_reduction <add>, %11, %cst [0] : vector<2x8x128xf32> to vector<8x128xf32>
    %13 = arith.addf %10, %12 : vector<8x128xf32>
    %c0_9 = arith.constant 0 : index
    %c0_10 = arith.constant 0 : index
    %c0_11 = arith.constant 0 : index
    %14 = vector.load %arg4[%c0_9, %c0_10, %c0_11] : memref<1x8x128xf32, #tpu.memory_space<vmem>>, vector<1x8x128xf32>
    %15 = vector.shape_cast %14 : vector<1x8x128xf32> to vector<8x128xf32>
    %16 = vector.shape_cast %13 : vector<8x128xf32> to vector<1x8x128xf32>
    tpu.vector_store %arg4[%c0_9, %c0_10, %c0_11], %16 {strides = array<i32>} : memref<1x8x128xf32, #tpu.memory_space<vmem>>, vector<1x8x128xf32>,
    return
  }
  func.func @transform_0(%arg0: i32, %arg1: i32) -> (i32, i32, i32) {
    %c0_i32 = arith.constant 0 : i32
    %c0_i32_0 = arith.constant 0 : i32
    return %arg0, %arg1, %c0_i32 : i32, i32, i32
  }
  func.func @transform_1(%arg0: i32, %arg1: i32) -> (i32, i32, i32) {
    %c0_i32 = arith.constant 0 : i32
    %c0_i32_0 = arith.constant 0 : i32
    return %arg0, %arg1, %c0_i32 : i32, i32, i32
  }
  func.func @transform_2(%arg0: i32, %arg1: i32) -> (i32, i32, i32) {
    %c0_i32 = arith.constant 0 : i32
    %c0_i32_0 = arith.constant 0 : i32
    %c0_i32_1 = arith.constant 0 : i32
    return %arg0, %c0_i32, %c0_i32_0 : i32, i32, i32
  }
}

</mosaic_0001>

<llo_original>
// kernel: tpu_custom_call.1
$region0: #{tpu_custom_call.1}
  #allocation0 [shape = 'u32[]', space=smem, size = 0x4, offset = 0x4, fixed_abs, tag = 'smem constant byte address 0x4 - core index']
  #allocation1 [shape = 'u32[144,128]{1,0:T(1,128)}', space=vmem, size = 0x12000, scoped, tag = 'internal scratch']
  %s0 = inlined_call_operand.hbm [shape: f32[2,16,128], index: 0, kind: input, shape index: {}]
  %s1 = inlined_call_operand.hbm [shape: f32[2,16,128], index: 1, kind: input, shape index: {}]
  %s2 = inlined_call_operand.hbm [shape: f32[2,8,128], index: 2, kind: output, shape index: {}]
  %s3 = sld [smem:[#allocation0]]
  $region53: #{tpu_custom_call.1} parent=0
    _
  %s5 = ssub.s32 1, %s3
  %s6 = scalar_select 0, %s5, %s3
  $region1: #{tpu_custom_call.1} parent=0
    #allocation2 [shape = 'u8[16384]{0}', space=vmem, size = 0x4000, scoped, tag = 'input window, operand 0']
    #allocation3 [shape = 's32[2]{0}', space=sflag, size = 0x8, scoped, tag = 'scoped memory for tpu_custom_call.1']
    #allocation4 [shape = 's32[2]{0}', space=sflag, size = 0x8, scoped, tag = 'scoped memory for tpu_custom_call.1']
    #allocation5 [shape = 'u8[16384]{0}', space=vmem, size = 0x4000, scoped, tag = 'input window, operand 1']
    #allocation6 [shape = 's32[2]{0}', space=sflag, size = 0x8, scoped, tag = 'scoped memory for tpu_custom_call.1']
    #allocation7 [shape = 'u8[8192]{0}', space=vmem, size = 0x2000, scoped, tag = 'output window, operand 0']
    %7 = vsyncpa [#allocation3], 0
    %s8 = scalar_lea.sflag [#allocation3], 1
    %9 = vsyncpa %s8, 0
    %10 = vsyncpa [#allocation6], 0
    %s11 = scalar_lea.sflag [#allocation6], 1
    %12 = vsyncpa %s11, 0
    %13 = vsyncpa [#allocation4], 0
    %s14 = scalar_lea.sflag [#allocation4], 1
    %15 = vsyncpa %s14, 0
    loop: start=0, step=1, limit=4
    $region2: #{tpu_custom_call.1} parent=1 // loop_pre_header
      _
    $region3: #{tpu_custom_call.1} parent=1 // loop_header
      %s17 = sphi 0, %s21
      %p18 = scmp.ge.s32.totalorder %s17, 4
      %s24 = sphi 0, %s36
      %s25 = sphi 0, %s32
      %s26 = sphi 0, %s24
      %s27 = sphi 0, %s25
      %s28 = sphi 0, %s26
      %s29 = sphi 0, %s27
      %s41 = sphi 0, %s43
      %s44 = sphi 0, %s41
      %s45 = sphi 0, %s44
      %s61 = sphi 0, %s45
      %s69 = sphi 0, %s71
      %s72 = sphi 0, %s69
      %s73 = sphi 0, %s72
      %s89 = sphi 0, %s73
      %s95 = sphi 0, %s97
      %s98 = sphi 0, %s95
      %s99 = sphi 0, %s98
      %s115 = sphi 0, %s99
    $region4: #{tpu_custom_call.1} parent=1 // loop_header_branch
      %20 = sbr.rel (%p18) target = $region8
    $region5: #{tpu_custom_call.1} parent=1 // loop_body
      %s22 = ssub.s32 %s17, 1
      %s23 = ssub.s32 %s17, 2
      %s30 = sadd.s32 1, %s25
      %p31 = scmp.ge.s32.totalorder %s30, 1
      %s32 = scalar_select %p31, 0, %s30
      %s33 = sadd.s32 1, %s24
      %s34 = scalar_select %p31, %s33, %s24
      %p35 = scmp.ge.s32.totalorder %s34, 2
      %s36 = scalar_select %p35, 0, %s34
      %s37 = ssub.s32 %s24, %s36
      %s38 = ssub.s32 %s25, %s32
      %s39 = sor.u32 %s37, %s38
      %p40 = scmp.eq.s32.totalorder %s39, 0
      %s42 = sadd.s32 %s41, 1
      %s43 = scalar_select %p40, %s41, %s42
      %p46 = pneg %p40
      %p47 = scmp.eq.s32.totalorder %s17, 1
      %p48 = por %p46, %p47
      %p49 = scmp.ne.s32.totalorder %s41, %s44
      %p50 = scmp.eq.s32.totalorder %s17, 0
      %p51 = por %p49, %p50
      %p52 = scmp.ne.s32.totalorder %s41, %s44
      %p53 = scmp.eq.s32.totalorder %s22, 1
      %p54 = por %p52, %p53
      %p55 = scmp.ne.s32.totalorder %s44, %s45
      %p56 = scmp.eq.s32.totalorder %s22, 0
      %p57 = por %p55, %p56
      %p58 = scmp.ne.s32.totalorder %s44, %s45
      %p59 = scmp.eq.s32.totalorder %s23, 1
      %p60 = por %p58, %p59
      %p62 = scmp.ne.s32.totalorder %s45, %s61
      %p63 = scmp.eq.s32.totalorder %s23, 0
      %p64 = por %p62, %p63
      %s65 = ssub.s32 %s24, %s36
      %s66 = ssub.s32 %s25, %s32
      %s67 = sor.u32 %s65, %s66
      %p68 = scmp.eq.s32.totalorder %s67, 0
      %s70 = sadd.s32 %s69, 1
      %s71 = scalar_select %p68, %s69, %s70
      %p74 = pneg %p68
      %p75 = scmp.eq.s32.totalorder %s17, 1
      %p76 = por %p74, %p75
      %p77 = scmp.ne.s32.totalorder %s69, %s72
      %p78 = scmp.eq.s32.totalorder %s17, 0
      %p79 = por %p77, %p78
      %p80 = scmp.ne.s32.totalorder %s69, %s72
      %p81 = scmp.eq.s32.totalorder %s22, 1
      %p82 = por %p80, %p81
      %p83 = scmp.ne.s32.totalorder %s72, %s73
      %p84 = scmp.eq.s32.totalorder %s22, 0
      %p85 = por %p83, %p84
      %p86 = scmp.ne.s32.totalorder %s72, %s73
      %p87 = scmp.eq.s32.totalorder %s23, 1
      %p88 = por %p86, %p87
      %p90 = scmp.ne.s32.totalorder %s73, %s89
      %p91 = scmp.eq.s32.totalorder %s23, 0
      %p92 = por %p90, %p91
      %s93 = ssub.s32 %s24, %s36
      %p94 = scmp.eq.s32.totalorder %s93, 0
      %s96 = sadd.s32 %s95, 1
      %s97 = scalar_select %p94, %s95, %s96
      %p100 = pneg %p94
      %p101 = scmp.eq.s32.totalorder %s17, 1
      %p102 = por %p100, %p101
      %p103 = scmp.ne.s32.totalorder %s95, %s98
      %p104 = scmp.eq.s32.totalorder %s17, 0
      %p105 = por %p103, %p104
      %p106 = scmp.ne.s32.totalorder %s95, %s98
      %p107 = scmp.eq.s32.totalorder %s22, 1
      %p108 = por %p106, %p107
      %p109 = scmp.ne.s32.totalorder %s98, %s99
      %p110 = scmp.eq.s32.totalorder %s22, 0
      %p111 = por %p109, %p110
      %p112 = scmp.ne.s32.totalorder %s98, %s99
      %p113 = scmp.eq.s32.totalorder %s23, 1
      %p114 = por %p112, %p113
      %p116 = scmp.ne.s32.totalorder %s99, %s115
      %p117 = scmp.eq.s32.totalorder %s23, 0
      %p118 = por %p116, %p117
      %p119 = scmp.le.s32.totalorder 1, %s17
      %p120 = scmp.lt.s32.totalorder %s17, 3
      %p121 = pnand %p119, %p120
      %p122 = pneg %p121
      // Predicated region
      $region9: #{tpu_custom_call.1} parent=5 // pred_check
        _
      $region10: #{tpu_custom_call.1} parent=5 // pred_check_branch
        %124 = sbr.rel (%p121) target = $region12
      $region11: #{tpu_custom_call.1} parent=5 // pred_region
        %s125 = ssub.s32 %s17, 1
      $region12: #{tpu_custom_call.1} parent=5 // pred_fallthru
        _
      %p126 = scmp.lt.s32.totalorder %s17, 2
      // Predicated region
      $region13: #{tpu_custom_call.1} parent=5 // pred_check
        %p127 = pneg %p126
      $region14: #{tpu_custom_call.1} parent=5 // pred_check_branch
        %129 = sbr.rel (%p127) target = $region16
      $region15: #{tpu_custom_call.1} parent=5 // pred_region
        // Predicated region
        $region17: #{tpu_custom_call.1} parent=15 // pred_check
          %p130 = pneg %p51
        $region18: #{tpu_custom_call.1} parent=15 // pred_check_branch
          %132 = sbr.rel (%p130) target = $region20
        $region19: #{tpu_custom_call.1} parent=15 // pred_region
          %s133 = sand.u32 %s41, 1
          %s134 = scalar_lea.sflag [#allocation3], %s133
          %s135 = sand.u32 %s41, 1
          %s136 = smul.addr %s135, 16
          %s137 = scalar_lea.vmem [#allocation2], %s136
          %s138 = smul.u32 2, %s25
          %s140 = ssub.s32 256, 256
          %141 = vsyncadd %s134, %s140
          %s142 = smul.addr %s24, 2
          %s143 = sadd.s32 %s138, %s142
          %s144 = smul.addr %s143, 128
          %s145 = scalar_lea.hbm %s0, %s144
          %s146 = sshll.u32 %s137, 4
          %s147 = int_to_ptr.vmem [resolvable:$true] %s146
          %152 = dma.hbm_to_vmem [thread:$0]  %s145, 256, %s147, %s134, 128, 128, 8
        $region20: #{tpu_custom_call.1} parent=15 // pred_fallthru
          _
        // Predicated region
        $region21: #{tpu_custom_call.1} parent=15 // pred_check
          %p153 = pneg %p79
        $region22: #{tpu_custom_call.1} parent=15 // pred_check_branch
          %155 = sbr.rel (%p153) target = $region24
        $region23: #{tpu_custom_call.1} parent=15 // pred_region
          %s156 = sand.u32 %s69, 1
          %s157 = scalar_lea.sflag [#allocation6], %s156
          %s158 = sand.u32 %s69, 1
          %s159 = smul.addr %s158, 16
          %s160 = scalar_lea.vmem [#allocation5], %s159
          %s161 = smul.u32 2, %s25
          %s163 = ssub.s32 256, 256
          %164 = vsyncadd %s157, %s163
          %s165 = smul.addr %s24, 2
          %s166 = sadd.s32 %s161, %s165
          %s167 = smul.addr %s166, 128
          %s168 = scalar_lea.hbm %s1, %s167
          %s169 = sshll.u32 %s160, 4
          %s170 = int_to_ptr.vmem [resolvable:$true] %s169
          %175 = dma.hbm_to_vmem [thread:$0]  %s168, 256, %s170, %s157, 128, 128, 8
        $region24: #{tpu_custom_call.1} parent=15 // pred_fallthru
          _
      $region16: #{tpu_custom_call.1} parent=5 // pred_fallthru
        _
      %p176 = scmp.le.s32.totalorder 1, %s17
      %p177 = scmp.lt.s32.totalorder %s17, 3
      %p178 = pnand %p176, %p177
      %p179 = pneg %p178
      // Predicated region
      $region25: #{tpu_custom_call.1} parent=5 // pred_check
        _
      $region26: #{tpu_custom_call.1} parent=5 // pred_check_branch
        %181 = sbr.rel (%p178) target = $region28
      $region27: #{tpu_custom_call.1} parent=5 // pred_region
        %s182 = ssub.s32 %s17, 1
        %s183 = sand.u32 %s44, 1
        %s184 = scalar_lea.sflag [#allocation3], %s183
        %s185 = sand.u32 %s44, 1
        %s186 = smul.addr %s185, 16
        %s187 = scalar_lea.vmem [#allocation2], %s186
        // Predicated region
        $region29: #{tpu_custom_call.1} parent=27 // pred_check
          %p188 = pneg %p57
        $region30: #{tpu_custom_call.1} parent=27 // pred_check_branch
          %190 = sbr.rel (%p188) target = $region32
        $region31: #{tpu_custom_call.1} parent=27 // pred_region
          %191 = dma.done %s184, 256
        $region32: #{tpu_custom_call.1} parent=27 // pred_fallthru
          _
        %s192 = sand.u32 %s72, 1
        %s193 = scalar_lea.sflag [#allocation6], %s192
        %s194 = sand.u32 %s72, 1
        %s195 = smul.addr %s194, 16
        %s196 = scalar_lea.vmem [#allocation5], %s195
        // Predicated region
        $region33: #{tpu_custom_call.1} parent=27 // pred_check
          %p197 = pneg %p85
        $region34: #{tpu_custom_call.1} parent=27 // pred_check_branch
          %199 = sbr.rel (%p197) target = $region36
        $region35: #{tpu_custom_call.1} parent=27 // pred_region
          %200 = dma.done %s193, 256
        $region36: #{tpu_custom_call.1} parent=27 // pred_fallthru
          _
        %s201 = sand.u32 %s44, 1
        %s202 = scalar_lea.sflag [#allocation3], %s201
        %s203 = sand.u32 %s44, 1
        %s204 = smul.addr %s203, 16
        %s205 = scalar_lea.vmem [#allocation2], %s204
        %p206 = pneg %p57
        %p207 = pneg %p54
        %s208 = sand.u32 %s72, 1
        %s209 = scalar_lea.sflag [#allocation6], %s208
        %s210 = sand.u32 %s72, 1
        %s211 = smul.addr %s210, 16
        %s212 = scalar_lea.vmem [#allocation5], %s211
        %p213 = pneg %p85
        %p214 = pneg %p82
        %p215 = pneg %p111
        %p216 = pneg %p108
        %s217 = sand.u32 %s98, 1
        %s218 = scalar_lea.sflag [#allocation4], %s217
        %s219 = sand.u32 %s98, 1
        %s220 = smul.addr %s219, 8
        %s221 = scalar_lea.vmem [#allocation7], %s220
        %s222 = smul.u32 2, %s27
        %s223 = smul.u32 2, %s27
        %p224 = scmp.eq.s32.totalorder %s27, 0
        // Predicated region
        $region37: #{tpu_custom_call.1} parent=27 // pred_check
          %p225 = pneg %p224
        $region38: #{tpu_custom_call.1} parent=27 // pred_check_branch
          %227 = sbr.rel (%p225) target = $region40
        $region39: #{tpu_custom_call.1} parent=27 // pred_region
          %228 = vst [vmem:[%s221] sm:$0xff] 0.0
        $region40: #{tpu_custom_call.1} parent=27 // pred_fallthru
          _
        %v229 = vld [vmem:[%s187] sm:$0xff]
        %v230 = vld [vmem:[%s187 + $0x8] sm:$0xff]
        %v231 = vld [vmem:[%s196] sm:$0xff]
        %v232 = vld [vmem:[%s196 + $0x8] sm:$0xff]
        %v233 = vsub.f32 %v229, %v231
        %v234 = vsub.f32 %v230, %v232
        %v235 = vmul.f32 %v233, %v233
        %v236 = vmul.f32 %v234, %v234
        %v237 = vld [vmem:[%s221] sm:$0xff]
        %v238 = vadd.f32 %v235, %v236
        %v239 = vadd.f32 %v237, %v238
        %240 = vst [vmem:[%s221] sm:$0xff] %v239
        %s241 = sand.u32 %s98, 1
        %s242 = scalar_lea.sflag [#allocation4], %s241
        %s243 = sand.u32 %s98, 1
        %s244 = smul.addr %s243, 8
        %s245 = scalar_lea.vmem [#allocation7], %s244
        // Predicated region
        $region41: #{tpu_custom_call.1} parent=27 // pred_check
          %p246 = pneg %p108
        $region42: #{tpu_custom_call.1} parent=27 // pred_check_branch
          %248 = sbr.rel (%p246) target = $region44
        $region43: #{tpu_custom_call.1} parent=27 // pred_region
          %s250 = ssub.s32 128, 128
          %251 = vsyncadd %s242, %s250
          %s252 = smul.addr %s26, 128
          %s253 = scalar_lea.hbm %s2, %s252
          %s255 = sshll.u32 %s245, 4
          %s256 = int_to_ptr.vmem [resolvable:$true] %s255
          %258 = dma.vmem_to_hbm [thread:$0]  %s256, 128, %s253, %s242
        $region44: #{tpu_custom_call.1} parent=27 // pred_fallthru
          _
      $region28: #{tpu_custom_call.1} parent=5 // pred_fallthru
        _
      %p259 = scmp.le.s32.totalorder 2, %s17
      // Predicated region
      $region45: #{tpu_custom_call.1} parent=5 // pred_check
        %p260 = pneg %p259
      $region46: #{tpu_custom_call.1} parent=5 // pred_check_branch
        %262 = sbr.rel (%p260) target = $region48
      $region47: #{tpu_custom_call.1} parent=5 // pred_region
        %s263 = ssub.s32 %s17, 2
        // Predicated region
        $region49: #{tpu_custom_call.1} parent=47 // pred_check
          %p264 = pneg %p114
        $region50: #{tpu_custom_call.1} parent=47 // pred_check_branch
          %266 = sbr.rel (%p264) target = $region52
        $region51: #{tpu_custom_call.1} parent=47 // pred_region
          %s267 = sand.u32 %s99, 1
          %s268 = scalar_lea.sflag [#allocation4], %s267
          %s269 = sand.u32 %s99, 1
          %s270 = smul.addr %s269, 8
          %s271 = scalar_lea.vmem [#allocation7], %s270
          %272 = dma.done %s268, 128
        $region52: #{tpu_custom_call.1} parent=47 // pred_fallthru
          _
      $region48: #{tpu_custom_call.1} parent=5 // pred_fallthru
        _
    $region6: #{tpu_custom_call.1} parent=1 // loop_footer
      %s21 = sadd.s32 1, %s17
    $region7: #{tpu_custom_call.1} parent=1 // loop_footer_branch
      %16 = sbr.rel target = $region3
    $region8: #{tpu_custom_call.1} parent=1 // loop_exit
      _
    %273 = vsyncpa [#allocation3], 1
    %s274 = scalar_lea.sflag [#allocation3], 1
    %275 = vsyncpa %s274, 1
    %276 = vsyncpa [#allocation6], 1
    %s277 = scalar_lea.sflag [#allocation6], 1
    %278 = vsyncpa %s277, 1
    %279 = vsyncpa [#allocation4], 1
    %s280 = scalar_lea.sflag [#allocation4], 1
    %281 = vsyncpa %s280, 1

</llo_original>
